<compile_context>
chip_gen: v7x
topology: tpu7x:2x2x1
jax: 0.10.0
libtpu: 0.0.40
codegen_flags: <defaults>
</compile_context>

<pallas_src>
import functools

import jax
import jax.numpy as jnp
from jax.experimental import pallas as pl
from jax.experimental.pallas import tpu as pltpu

EPS = 1e-5  # nn.BatchNorm1d default eps


# --------------------------------------------------------------------------- #
# Kernels
# --------------------------------------------------------------------------- #
def _stats_kernel(x_ref, w_ref, b_ref, sum_ref, sumsq_ref, *, true_l):
    """Pass 1: accumulate per-channel sum / sum-of-squares of relu(conv(x))."""
    n = pl.program_id(0)
    li = pl.program_id(1)

    @pl.when(jnp.logical_and(n == 0, li == 0))
    def _():
        sum_ref[...] = jnp.zeros_like(sum_ref)
        sumsq_ref[...] = jnp.zeros_like(sumsq_ref)

    x = x_ref[0]            # (C_in, TL)  -- native dtype, straight to the MXU
    w = w_ref[...]          # (C_out, C_in)
    y = jnp.dot(w, x, preferred_element_type=jnp.float32) + b_ref[...]
    y = jnp.maximum(y, 0.0)                         # (C_out, TL), f32

    # Mask lanes belonging to a partial last L tile out of the statistics.
    tl = x_ref.shape[-1]
    lane = jax.lax.broadcasted_iota(jnp.int32, (1, tl), 1)
    valid = (li * tl + lane) < true_l
    y = jnp.where(valid, y, 0.0)

    # Cross-lane reduces go to the XLU; accumulator stays resident in VMEM.
    sum_ref[...] += jnp.sum(y, axis=1, keepdims=True)
    sumsq_ref[...] += jnp.sum(y * y, axis=1, keepdims=True)


def _apply_kernel(x_ref, w_ref, p_ref, o_ref):
    """Pass 2: recompute conv+relu per tile and apply the fused BN affine."""
    x = x_ref[0]            # (C_in, TL)
    w = w_ref[...]          # (C_out, C_in)
    b = p_ref[:, 0:1]       # (C_out, 1)
    scale = p_ref[:, 1:2]   # gamma * rsqrt(var + eps)
    shift = p_ref[:, 2:3]   # beta - mean * scale

    y = jnp.dot(w, x, preferred_element_type=jnp.float32) + b
    y = jnp.maximum(y, 0.0)
    o_ref[0] = (y * scale + shift).astype(o_ref.dtype)


# --------------------------------------------------------------------------- #
# Tiling / VMEM heuristics
# --------------------------------------------------------------------------- #
def _pick_block_l(L, c_in, c_out, itemsize=4, budget_bytes=24 << 20):
    """Largest L tile (multiple of 128 when tiling) whose double-buffered
    input+output blocks fit a conservative VMEM budget (safe on v7x)."""
    if L <= 1024:
        return L
    tl = 2048
    while tl > 256 and 2 * 2 * (c_in + c_out) * tl * itemsize > budget_bytes:
        tl //= 2
    return tl


def _vmem_limit_bytes(c_in, c_out, block_l, itemsize=4):
    blocks = 2 * 2 * (c_in + c_out) * block_l * itemsize   # double-buffered x/out
    weights = c_out * (c_in + 8) * 4                       # resident w + params
    need = int((blocks + weights) * 1.5) + (4 << 20)
    return max(32 << 20, min(64 << 20, need))              # cap for v7x's 64 MiB


# --------------------------------------------------------------------------- #
# Wrapper
# --------------------------------------------------------------------------- #
def shared_mlp_block(x_ncl, conv_w, conv_b, bn_gamma, bn_beta, *, block_l=None):
    """x_ncl: (N, C_in, L).  conv_w: (C_out, C_in, 1) PyTorch Conv1d layout."""
    N, C_in, L = x_ncl.shape
    C_out = conv_w.shape[0]

    w = conv_w[:, :, 0]                                    # (C_out, C_in): already right
    b = conv_b.reshape(C_out, 1).astype(jnp.float32)

    if block_l is None:
        block_l = _pick_block_l(L, C_in, C_out)
    grid = (N, pl.cdiv(L, block_l))
    vmem_limit = _vmem_limit_bytes(C_in, C_out, block_l)

    x_spec = pl.BlockSpec((1, C_in, block_l), lambda n, l: (n, 0, l))
    w_spec = pl.BlockSpec((C_out, C_in), lambda n, l: (0, 0))

    def vec_spec(cols):
        return pl.BlockSpec((C_out, cols), lambda n, l: (0, 0))

    # ---- pass 1: per-channel statistics of relu(conv(x)) -------------------
    sums, sumsqs = pl.pallas_call(
        functools.partial(_stats_kernel, true_l=L),
        grid=grid,
        in_specs=[x_spec, w_spec, vec_spec(1)],
        out_specs=[vec_spec(1), vec_spec(1)],
        out_shape=[jax.ShapeDtypeStruct((C_out, 1), jnp.float32)] * 2,
        compiler_params=pltpu.CompilerParams(
            dimension_semantics=("arbitrary", "arbitrary"),   # resident accumulator
            vmem_limit_bytes=vmem_limit),
    )(x_ncl, w, b)

    # ---- tiny per-channel BN math (C_out elements) in plain JAX ------------
    count = float(N * L)
    mean = sums / count
    # Single-pass E[y^2]-E[y]^2 in f32; clamp guards tiny negative cancellation.
    var = jnp.maximum(sumsqs / count - mean * mean, 0.0)     # biased (training) var
    scale = bn_gamma.reshape(C_out, 1) * jax.lax.rsqrt(var + EPS)
    shift = bn_beta.reshape(C_out, 1) - mean * scale
    params = jnp.concatenate([b, scale, shift], axis=1)      # (C_out, 3) single operand

    # ---- pass 2: recompute conv+relu and apply fused affine, NCL output ----
    out = pl.pallas_call(
        _apply_kernel,
        grid=grid,
        in_specs=[x_spec, w_spec, vec_spec(3)],
        out_specs=pl.BlockSpec((1, C_out, block_l), lambda n, l: (n, 0, l)),
        out_shape=jax.ShapeDtypeStruct((N, C_out, L), x_ncl.dtype),
        compiler_params=pltpu.CompilerParams(
            dimension_semantics=("parallel", "parallel"),     # shard tiles on v7x's 2 TCs
            vmem_limit_bytes=vmem_limit),
    )(x_ncl, w, params)
    return out


# --------------------------------------------------------------------------- #
# Pure-JAX reference (matches PyTorch training-mode forward)
# --------------------------------------------------------------------------- #
def reference(x_ncl, conv_w, conv_b, bn_gamma, bn_beta):
    y = jnp.einsum("ncl,oc->nol", x_ncl, conv_w[:, :, 0]) + conv_b[None, :, None]
    y = jnp.maximum(y, 0.0)
    mean = jnp.mean(y, axis=(0, 2), keepdims=True)
    var = jnp.mean((y - mean) ** 2, axis=(0, 2), keepdims=True)
    y = (y - mean) * jax.lax.rsqrt(var + EPS)
    return y * bn_gamma[None, :, None] + bn_beta[None, :, None]


if __name__ == "__main__":
    key = jax.random.PRNGKey(0)
    N, C_in, C_out, L = 2, 4, 8, 16

    k_x, k_w, k_b = jax.random.split(key, 3)
    x = jax.random.normal(k_x, (N, C_in, L), dtype=jnp.float32)

    # Shapes match nn.Conv1d / nn.BatchNorm1d parameters.
    conv_w = jax.random.normal(k_w, (C_out, C_in, 1), dtype=jnp.float32) * 0.1
    conv_b = jax.random.normal(k_b, (C_out,), dtype=jnp.float32) * 0.1
    bn_gamma = jnp.ones((C_out,), dtype=jnp.float32)
    bn_beta = jnp.zeros((C_out,), dtype=jnp.float32)

    # TODO(synk): BatchNorm1d running_mean/running_var buffer updates are
    # stateful bookkeeping and not part of the forward output; not implemented.
    out = shared_mlp_block(x, conv_w, conv_b, bn_gamma, bn_beta)
    out = jax.block_until_ready(out)

    ref = reference(x, conv_w, conv_b, bn_gamma, bn_beta)
    assert out.shape == (N, C_out, L)
    assert jnp.allclose(out, ref, atol=1e-4, rtol=1e-4)

    print("KERNEL_OK")
</pallas_src>

<mosaic_0001>
module attributes {stable_mosaic.version = 11 : i64} {
  func.func @_stats_kernel(%arg0: i32, %arg1: i32, %arg2: memref<1x4x16xf32, #tpu.memory_space<vmem>>, %arg3: memref<8x4xf32, #tpu.memory_space<vmem>>, %arg4: memref<8x1xf32, #tpu.memory_space<vmem>>, %arg5: memref<8x1xf32, #tpu.memory_space<vmem>>, %arg6: memref<8x1xf32, #tpu.memory_space<vmem>>) attributes {dimension_semantics = [#tpu.dimension_semantics<arbitrary>, #tpu.dimension_semantics<arbitrary>], iteration_bounds = array<i64: 2, 1>, scalar_prefetch = 0 : i64, scratch_operands = 0 : i64, tpu.core_type = #tpu.core_type<tc>, window_params = [{transform_indices = @transform_0, window_bounds = array<i64: 1, 4, 16>}, {pipeline_mode = #tpu.pipeline_mode<synchronous>, transform_indices = @transform_1, window_bounds = array<i64: 8, 4>}, {pipeline_mode = #tpu.pipeline_mode<synchronous>, transform_indices = @transform_2, window_bounds = array<i64: 8, 1>}, {pipeline_mode = #tpu.pipeline_mode<synchronous>, transform_indices = @transform_3, window_bounds = array<i64: 8, 1>}, {pipeline_mode = #tpu.pipeline_mode<synchronous>, transform_indices = @transform_4, window_bounds = array<i64: 8, 1>}]} {
    %c0_i32 = arith.constant 0 : i32
    %0 = arith.cmpi eq, %arg0, %c0_i32 : i32
    %c0_i32_0 = arith.constant 0 : i32
    %1 = arith.cmpi eq, %arg1, %c0_i32_0 : i32
    %2 = arith.andi %0, %1 : i1
    %3 = arith.extui %2 : i1 to i32
    %c0_i32_1 = arith.constant 0 : i32
    %4 = arith.cmpi ne, %3, %c0_i32_1 : i32
    scf.if %4 {
      %cst_21 = arith.constant 0.000000e+00 : f32
      %35 = vector.broadcast %cst_21 : f32 to vector<8x1xf32>
      %c0_22 = arith.constant 0 : index
      %c0_23 = arith.constant 0 : index
      %36 = vector.load %arg5[%c0_22, %c0_23] : memref<8x1xf32, #tpu.memory_space<vmem>>, vector<8x1xf32>
      tpu.vector_store %arg5[%c0_22, %c0_23], %35 {strides = array<i32>} : memref<8x1xf32, #tpu.memory_space<vmem>>, vector<8x1xf32>,
      %cst_24 = arith.constant 0.000000e+00 : f32
      %37 = vector.broadcast %cst_24 : f32 to vector<8x1xf32>
      %c0_25 = arith.constant 0 : index
      %c0_26 = arith.constant 0 : index
      %38 = vector.load %arg6[%c0_25, %c0_26] : memref<8x1xf32, #tpu.memory_space<vmem>>, vector<8x1xf32>
      tpu.vector_store %arg6[%c0_25, %c0_26], %37 {strides = array<i32>} : memref<8x1xf32, #tpu.memory_space<vmem>>, vector<8x1xf32>,
    } else {
    }
    %c0 = arith.constant 0 : index
    %c0_2 = arith.constant 0 : index
    %c0_3 = arith.constant 0 : index
    %5 = vector.load %arg2[%c0, %c0_2, %c0_3] : memref<1x4x16xf32, #tpu.memory_space<vmem>>, vector<1x4x16xf32>
    %6 = vector.shape_cast %5 : vector<1x4x16xf32> to vector<4x16xf32>
    %c0_4 = arith.constant 0 : index
    %c0_5 = arith.constant 0 : index
    %7 = vector.load %arg3[%c0_4, %c0_5] : memref<8x4xf32, #tpu.memory_space<vmem>>, vector<8x4xf32>
    %cst = arith.constant dense<0.000000e+00> : vector<8x16xf32>
    %8 = tpu.matmul %7, %6, %cst {dimension_numbers = #tpu.dot_dimension_numbers<[1], [0], [0], [1], [0, 0, 1, 1], [], []>} : vector<8x4xf32>, vector<4x16xf32>, vector<8x16xf32> -> vector<8x16xf32>
    %c0_6 = arith.constant 0 : index
    %c0_7 = arith.constant 0 : index
    %9 = vector.load %arg4[%c0_6, %c0_7] : memref<8x1xf32, #tpu.memory_space<vmem>>, vector<8x1xf32>
    %10 = vector.broadcast %9 : vector<8x1xf32> to vector<8x16xf32>
    %11 = arith.addf %8, %10 : vector<8x16xf32>
    %cst_8 = arith.constant 0.000000e+00 : f32
    %12 = vector.broadcast %cst_8 : f32 to vector<8x16xf32>
    %13 = arith.maximumf %11, %12 : vector<8x16xf32>
    %14 = tpu.iota {dimensions = array<i32: 1>} : vector<1x16xi32>
    %c16_i32 = arith.constant 16 : i32
    %15 = arith.muli %arg1, %c16_i32 : i32
    %16 = vector.broadcast %15 : i32 to vector<1x16xi32>
    %17 = arith.addi %16, %14 : vector<1x16xi32>
    %c16_i32_9 = arith.constant 16 : i32
    %18 = vector.broadcast %c16_i32_9 : i32 to vector<1x16xi32>
    %19 = arith.cmpi slt, %17, %18 : vector<1x16xi32>
    %cst_10 = arith.constant 0.000000e+00 : f32
    %20 = vector.shape_cast %19 : vector<1x16xi1> to vector<1x16xi1>
    %21 = vector.broadcast %20 : vector<1x16xi1> to vector<8x16xi1>
    %22 = vector.broadcast %cst_10 : f32 to vector<8x16xf32>
    %23 = arith.select %21, %13, %22 : vector<8x16xi1>, vector<8x16xf32>
    %c0_11 = arith.constant 0 : index
    %c0_12 = arith.constant 0 : index
    %24 = vector.load %arg5[%c0_11, %c0_12] : memref<8x1xf32, #tpu.memory_space<vmem>>, vector<8x1xf32>
    %cst_13 = arith.constant dense<0.000000e+00> : vector<8xf32>
    %25 = vector.multi_reduction <add>, %23, %cst_13 [1] : vector<8x16xf32> to vector<8xf32>
    %26 = vector.shape_cast %25 : vector<8xf32> to vector<8x1xf32>
    %27 = arith.addf %24, %26 : vector<8x1xf32>
    %c0_14 = arith.constant 0 : index
    %c0_15 = arith.constant 0 : index
    %28 = vector.load %arg5[%c0_14, %c0_15] : memref<8x1xf32, #tpu.memory_space<vmem>>, vector<8x1xf32>
    tpu.vector_store %arg5[%c0_14, %c0_15], %27 {strides = array<i32>} : memref<8x1xf32, #tpu.memory_space<vmem>>, vector<8x1xf32>,
    %c0_16 = arith.constant 0 : index
    %c0_17 = arith.constant 0 : index
    %29 = vector.load %arg6[%c0_16, %c0_17] : memref<8x1xf32, #tpu.memory_space<vmem>>, vector<8x1xf32>
    %30 = arith.mulf %23, %23 : vector<8x16xf32>
    %cst_18 = arith.constant dense<0.000000e+00> : vector<8xf32>
    %31 = vector.multi_reduction <add>, %30, %cst_18 [1] : vector<8x16xf32> to vector<8xf32>
    %32 = vector.shape_cast %31 : vector<8xf32> to vector<8x1xf32>
    %33 = arith.addf %29, %32 : vector<8x1xf32>
    %c0_19 = arith.constant 0 : index
    %c0_20 = arith.constant 0 : index
    %34 = vector.load %arg6[%c0_19, %c0_20] : memref<8x1xf32, #tpu.memory_space<vmem>>, vector<8x1xf32>
    tpu.vector_store %arg6[%c0_19, %c0_20], %33 {strides = array<i32>} : memref<8x1xf32, #tpu.memory_space<vmem>>, vector<8x1xf32>,
    return
  }
  func.func @transform_0(%arg0: i32, %arg1: i32) -> (i32, i32, i32) {
    %c0_i32 = arith.constant 0 : i32
    %c0_i32_0 = arith.constant 0 : i32
    return %arg0, %c0_i32, %arg1 : i32, i32, i32
  }
  func.func @transform_1(%arg0: i32, %arg1: i32) -> (i32, i32) {
    %c0_i32 = arith.constant 0 : i32
    %c0_i32_0 = arith.constant 0 : i32
    %c0_i32_1 = arith.constant 0 : i32
    return %c0_i32, %c0_i32_0 : i32, i32
  }
  func.func @transform_2(%arg0: i32, %arg1: i32) -> (i32, i32) {
    %c0_i32 = arith.constant 0 : i32
    %c0_i32_0 = arith.constant 0 : i32
    %c0_i32_1 = arith.constant 0 : i32
    return %c0_i32, %c0_i32_0 : i32, i32
  }
  func.func @transform_3(%arg0: i32, %arg1: i32) -> (i32, i32) {
    %c0_i32 = arith.constant 0 : i32
    %c0_i32_0 = arith.constant 0 : i32
    %c0_i32_1 = arith.constant 0 : i32
    return %c0_i32, %c0_i32_0 : i32, i32
  }
  func.func @transform_4(%arg0: i32, %arg1: i32) -> (i32, i32) {
    %c0_i32 = arith.constant 0 : i32
    %c0_i32_0 = arith.constant 0 : i32
    %c0_i32_1 = arith.constant 0 : i32
    return %c0_i32, %c0_i32_0 : i32, i32
  }
}

</mosaic_0001>

<llo_original>
// kernel: tpu_custom_call.1
$region0: #{tpu_custom_call.1}
  #allocation0 [shape = 'u32[]', space=smem, size = 0x4, offset = 0x4, fixed_abs, tag = 'smem constant byte address 0x4 - core index']
  #allocation1 [shape = 'u32[144,128]{1,0:T(1,128)}', space=vmem, size = 0x12000, scoped, tag = 'internal scratch']
  %s0 = inlined_call_operand.vmem [shape: f32[2,4,16], index: 0, kind: input, shape index: {}]
  %s1 = inlined_call_operand.vmem [shape: f32[8,4], index: 1, kind: input, shape index: {}]
  %s2 = inlined_call_operand.vmem [shape: f32[8,1], index: 2, kind: input, shape index: {}]
  %s3 = inlined_call_operand.vmem [shape: f32[8,1], index: 3, kind: output, shape index: {0}]
  %s4 = inlined_call_operand.vmem [shape: f32[8,1], index: 4, kind: output, shape index: {1}]
  %5 = xla_tuple %s3, %s4
  %s6 = sld [smem:[#allocation0]]
  $region57: #{tpu_custom_call.1} parent=0
    _
  %s8 = ssub.s32 1, %s6
  %s9 = scalar_select 0, %s8, %s6
  loop: start=0, step=1, limit=4
  $region2: #{tpu_custom_call.1} parent=0 // loop_pre_header
    _
  $region3: #{tpu_custom_call.1} parent=0 // loop_header
    %s11 = sphi 0, %s15
    %p12 = scmp.ge.s32.totalorder %s11, 4
    %s18 = sphi 0, %s30
    %s19 = sphi 0, %s26
    %s20 = sphi 0, %s18
    %s21 = sphi 0, %s19
    %s22 = sphi 0, %s20
    %s23 = sphi 0, %s21
    %s35 = sphi 0, %s37
    %s38 = sphi 0, %s35
    %s39 = sphi 0, %s38
    %s55 = sphi 0, %s39
    %s59 = sphi 0, %s59
    %s61 = sphi 0, %s59
    %s62 = sphi 0, %s61
    %s76 = sphi 0, %s62
    %s80 = sphi 0, %s80
    %s82 = sphi 0, %s80
    %s83 = sphi 0, %s82
    %s97 = sphi 0, %s83
    %s101 = sphi 0, %s101
    %s103 = sphi 0, %s101
    %s104 = sphi 0, %s103
    %s118 = sphi 0, %s104
    %s122 = sphi 0, %s122
    %s124 = sphi 0, %s122
    %s125 = sphi 0, %s124
    %s139 = sphi 0, %s125
  $region4: #{tpu_custom_call.1} parent=0 // loop_header_branch
    %14 = sbr.rel (%p12) target = $region8
  $region5: #{tpu_custom_call.1} parent=0 // loop_body
    %s16 = ssub.s32 %s11, 1
    %s17 = ssub.s32 %s11, 2
    %s24 = sadd.s32 1, %s19
    %p25 = scmp.ge.s32.totalorder %s24, 1
    %s26 = scalar_select %p25, 0, %s24
    %s27 = sadd.s32 1, %s18
    %s28 = scalar_select %p25, %s27, %s18
    %p29 = scmp.ge.s32.totalorder %s28, 2
    %s30 = scalar_select %p29, 0, %s28
    %s31 = ssub.s32 %s18, %s30
    %s32 = ssub.s32 %s19, %s26
    %s33 = sor.u32 %s31, %s32
    %p34 = scmp.eq.s32.totalorder %s33, 0
    %s36 = sadd.s32 %s35, 1
    %s37 = scalar_select %p34, %s35, %s36
    %p40 = pneg %p34
    %p41 = scmp.eq.s32.totalorder %s11, 1
    %p42 = por %p40, %p41
    %p43 = scmp.ne.s32.totalorder %s35, %s38
    %p44 = scmp.eq.s32.totalorder %s11, 0
    %p45 = por %p43, %p44
    %p46 = scmp.ne.s32.totalorder %s35, %s38
    %p47 = scmp.eq.s32.totalorder %s16, 1
    %p48 = por %p46, %p47
    %p49 = scmp.ne.s32.totalorder %s38, %s39
    %p50 = scmp.eq.s32.totalorder %s16, 0
    %p51 = por %p49, %p50
    %p52 = scmp.ne.s32.totalorder %s38, %s39
    %p53 = scmp.eq.s32.totalorder %s17, 1
    %p54 = por %p52, %p53
    %p56 = scmp.ne.s32.totalorder %s39, %s55
    %p57 = scmp.eq.s32.totalorder %s17, 0
    %p58 = por %p56, %p57
    %s60 = sadd.s32 %s59, 1
    %p63 = scmp.eq.s32.totalorder %s11, 1
    %p64 = scmp.ne.s32.totalorder %s59, %s61
    %p65 = scmp.eq.s32.totalorder %s11, 0
    %p66 = por %p64, %p65
    %p67 = scmp.ne.s32.totalorder %s59, %s61
    %p68 = scmp.eq.s32.totalorder %s16, 1
    %p69 = por %p67, %p68
    %p70 = scmp.ne.s32.totalorder %s61, %s62
    %p71 = scmp.eq.s32.totalorder %s16, 0
    %p72 = por %p70, %p71
    %p73 = scmp.ne.s32.totalorder %s61, %s62
    %p74 = scmp.eq.s32.totalorder %s17, 1
    %p75 = por %p73, %p74
    %p77 = scmp.ne.s32.totalorder %s62, %s76
    %p78 = scmp.eq.s32.totalorder %s17, 0
    %p79 = por %p77, %p78
    %s81 = sadd.s32 %s80, 1
    %p84 = scmp.eq.s32.totalorder %s11, 1
    %p85 = scmp.ne.s32.totalorder %s80, %s82
    %p86 = scmp.eq.s32.totalorder %s11, 0
    %p87 = por %p85, %p86
    %p88 = scmp.ne.s32.totalorder %s80, %s82
    %p89 = scmp.eq.s32.totalorder %s16, 1
    %p90 = por %p88, %p89
    %p91 = scmp.ne.s32.totalorder %s82, %s83
    %p92 = scmp.eq.s32.totalorder %s16, 0
    %p93 = por %p91, %p92
    %p94 = scmp.ne.s32.totalorder %s82, %s83
    %p95 = scmp.eq.s32.totalorder %s17, 1
    %p96 = por %p94, %p95
    %p98 = scmp.ne.s32.totalorder %s83, %s97
    %p99 = scmp.eq.s32.totalorder %s17, 0
    %p100 = por %p98, %p99
    %s102 = sadd.s32 %s101, 1
    %p105 = scmp.eq.s32.totalorder %s11, 1
    %p106 = scmp.ne.s32.totalorder %s101, %s103
    %p107 = scmp.eq.s32.totalorder %s11, 0
    %p108 = por %p106, %p107
    %p109 = scmp.ne.s32.totalorder %s101, %s103
    %p110 = scmp.eq.s32.totalorder %s16, 1
    %p111 = por %p109, %p110
    %p112 = scmp.ne.s32.totalorder %s103, %s104
    %p113 = scmp.eq.s32.totalorder %s16, 0
    %p114 = por %p112, %p113
    %p115 = scmp.ne.s32.totalorder %s103, %s104
    %p116 = scmp.eq.s32.totalorder %s17, 1
    %p117 = por %p115, %p116
    %p119 = scmp.ne.s32.totalorder %s104, %s118
    %p120 = scmp.eq.s32.totalorder %s17, 0
    %p121 = por %p119, %p120
    %s123 = sadd.s32 %s122, 1
    %p126 = scmp.eq.s32.totalorder %s11, 1
    %p127 = scmp.ne.s32.totalorder %s122, %s124
    %p128 = scmp.eq.s32.totalorder %s11, 0
    %p129 = por %p127, %p128
    %p130 = scmp.ne.s32.totalorder %s122, %s124
    %p131 = scmp.eq.s32.totalorder %s16, 1
    %p132 = por %p130, %p131
    %p133 = scmp.ne.s32.totalorder %s124, %s125
    %p134 = scmp.eq.s32.totalorder %s16, 0
    %p135 = por %p133, %p134
    %p136 = scmp.ne.s32.totalorder %s124, %s125
    %p137 = scmp.eq.s32.totalorder %s17, 1
    %p138 = por %p136, %p137
    %p140 = scmp.ne.s32.totalorder %s125, %s139
    %p141 = scmp.eq.s32.totalorder %s17, 0
    %p142 = por %p140, %p141
    %p143 = scmp.le.s32.totalorder 1, %s11
    %p144 = scmp.lt.s32.totalorder %s11, 3
    %p145 = pnand %p143, %p144
    %p146 = pneg %p145
    // Predicated region
    $region9: #{tpu_custom_call.1} parent=5 // pred_check
      _
    $region10: #{tpu_custom_call.1} parent=5 // pred_check_branch
      %148 = sbr.rel (%p145) target = $region12
    $region11: #{tpu_custom_call.1} parent=5 // pred_region
      %s149 = ssub.s32 %s11, 1
      // Predicated region
      $region13: #{tpu_custom_call.1} parent=11 // pred_check
        %p150 = pneg %p72
      $region14: #{tpu_custom_call.1} parent=11 // pred_check_branch
        %152 = sbr.rel (%p150) target = $region16
      $region15: #{tpu_custom_call.1} parent=11 // pred_region
        _
      $region16: #{tpu_custom_call.1} parent=11 // pred_fallthru
        _
      // Predicated region
      $region17: #{tpu_custom_call.1} parent=11 // pred_check
        %p153 = pneg %p93
      $region18: #{tpu_custom_call.1} parent=11 // pred_check_branch
        %155 = sbr.rel (%p153) target = $region20
      $region19: #{tpu_custom_call.1} parent=11 // pred_region
        _
      $region20: #{tpu_custom_call.1} parent=11 // pred_fallthru
        _
    $region12: #{tpu_custom_call.1} parent=5 // pred_fallthru
      _
    %p156 = scmp.lt.s32.totalorder %s11, 2
    // Predicated region
    $region21: #{tpu_custom_call.1} parent=5 // pred_check
      %p157 = pneg %p156
    $region22: #{tpu_custom_call.1} parent=5 // pred_check_branch
      %159 = sbr.rel (%p157) target = $region24
    $region23: #{tpu_custom_call.1} parent=5 // pred_region
      // Predicated region
      $region25: #{tpu_custom_call.1} parent=23 // pred_check
        %p160 = pneg %p45
      $region26: #{tpu_custom_call.1} parent=23 // pred_check_branch
        %162 = sbr.rel (%p160) target = $region28
      $region27: #{tpu_custom_call.1} parent=23 // pred_region
        %p163 = scmp.lt.s32.totalorder %s18, 1
        %s164 = scalar_select %p163, %s18, 1
        %p165 = scmp.lt.s32.totalorder %s19, 0
        %s166 = scalar_select %p165, %s19, 0
        %s167 = sadd.s32 %s166, %s164
        %s168 = smul.addr %s167, 4
        %s169 = scalar_lea.vmem %s0, %s168
      $region28: #{tpu_custom_call.1} parent=23 // pred_fallthru
        _
    $region24: #{tpu_custom_call.1} parent=5 // pred_fallthru
      _
    %p170 = scmp.le.s32.totalorder 1, %s11
    %p171 = scmp.lt.s32.totalorder %s11, 3
    %p172 = pnand %p170, %p171
    %p173 = pneg %p172
    // Predicated region
    $region29: #{tpu_custom_call.1} parent=5 // pred_check
      _
    $region30: #{tpu_custom_call.1} parent=5 // pred_check_branch
      %175 = sbr.rel (%p172) target = $region32
    $region31: #{tpu_custom_call.1} parent=5 // pred_region
      %s176 = ssub.s32 %s11, 1
      %p177 = scmp.lt.s32.totalorder %s20, 1
      %s178 = scalar_select %p177, %s20, 1
      %p179 = scmp.lt.s32.totalorder %s21, 0
      %s180 = scalar_select %p179, %s21, 0
      %s181 = sadd.s32 %s180, %s178
      %s182 = smul.addr %s181, 4
      %s183 = scalar_lea.vmem %s0, %s182
      %p184 = pneg %p51
      %p185 = pneg %p48
      %p186 = pneg %p72
      %p187 = pneg %p69
      %p188 = pneg %p93
      %p189 = pneg %p90
      %p190 = pneg %p114
      %p191 = pneg %p111
      %p192 = pneg %p135
      %p193 = pneg %p132
      %p194 = scmp.lt.s32.totalorder %s20, 1
      %s195 = scalar_select %p194, %s20, 1
      %p196 = scmp.lt.s32.totalorder %s21, 0
      %s197 = scalar_select %p196, %s21, 0
      %s198 = sadd.s32 %s197, %s195
      %s199 = smul.addr %s198, 4
      %s200 = scalar_lea.vmem %s0, %s199
      %p201 = scmp.eq.s32.totalorder %s20, 0
      %p202 = scmp.eq.s32.totalorder %s21, 0
      %p203 = pnand %p201, %p202
      %p204 = pneg %p203
      // Predicated region
      $region33: #{tpu_custom_call.1} parent=31 // pred_check
        _
      $region34: #{tpu_custom_call.1} parent=31 // pred_check_branch
        %206 = sbr.rel (%p203) target = $region36
      $region35: #{tpu_custom_call.1} parent=31 // pred_region
        %vm207 = vcmask 7168
        %208 = vst.msk [vmem:[%s3] sm:$0xff] %vm207, 0.0
        %209 = vst.msk [vmem:[%s4] sm:$0xff] %vm207, 0.0
      $region36: #{tpu_custom_call.1} parent=31 // pred_fallthru
        _
      %v210 = vld [vmem:[%s200] sm:$0xf]
      %v211 = vld [vmem:[%s1] sm:$0xff]
      %v212 = vld [vmem:[%s2] sm:$0xff]
      %214 = vset.pattern.permute.xlu0 0
      %215 = vperm.xlu0 %214, %v212
      %v216 = vpop.permute.xlu0 %215
      %vm218 = vcmask 31744
      %v220 = vsel %vm218, %v211, 0
      %vm222 = vcmask 1043456
      %v224 = vsel %vm222, %v210, 0
      %226 = vmatprep.subr.mxu0 0.0
      %227 = vmatpush1.msra.mxu0 %v224
      %228 = vmatprep.subr.mxu0 0.0
      %229 = vmatpush1.msra.mxu0 0.0
      %230 = vmatprep.subr.mxu0 0.0
      %231 = vmatpush1.msra.mxu0 0.0
      %232 = vmatprep.subr.mxu0 0.0
      %233 = vmatpush1.msra.mxu0 0.0
      %234 = vmatprep.subr.mxu0 0.0
      %235 = vmatpush1.msra.mxu0 0.0
      %236 = vmatprep.subr.mxu0 0.0
      %237 = vmatpush1.msra.mxu0 0.0
      %238 = vmatprep.subr.mxu0 0.0
      %239 = vmatpush1.msra.mxu0 0.0
      %240 = vmatprep.subr.mxu0 0.0
      %241 = vmatpush1.msra.mxu0 0.0
      %242 = vmatprep.subr.mxu0 0.0
      %243 = vmatpush1.msra.mxu0 0.0
      %244 = vmatprep.subr.mxu0 0.0
      %245 = vmatpush1.msra.mxu0 0.0
      %246 = vmatprep.subr.mxu0 0.0
      %247 = vmatpush1.msra.mxu0 0.0
      %248 = vmatprep.subr.mxu0 0.0
      %249 = vmatpush1.msra.mxu0 0.0
      %250 = vmatprep.subr.mxu0 0.0
      %251 = vmatpush1.msra.mxu0 0.0
      %252 = vmatprep.subr.mxu0 0.0
      %253 = vmatpush1.msra.mxu0 0.0
      %254 = vmatprep.subr.mxu0 0.0
      %255 = vmatpush1.msra.mxu0 0.0
      %256 = vmatprep.subr.mxu0 0.0
      %257 = vmatpush1.msra.mxu0 0.0
      %258 = vmatprep.subr.mxu0 0.0
      %259 = vmatpush1.msra.mxu0 0.0
      %260 = vmatprep.subr.mxu0 0.0
      %261 = vmatpush1.msra.mxu0 0.0
      %262 = vmatprep.subr.mxu0 0.0
      %263 = vmatpush1.msra.mxu0 0.0
      %264 = vmatprep.subr.mxu0 0.0
      %265 = vmatpush1.msra.mxu0 0.0
      %266 = vmatprep.subr.mxu0 0.0
      %267 = vmatpush1.msra.mxu0 0.0
      %268 = vmatprep.subr.mxu0 0.0
      %269 = vmatpush1.msra.mxu0 0.0
      %270 = vmatprep.subr.mxu0 0.0
      %271 = vmatpush1.msra.mxu0 0.0
      %272 = vmatprep.subr.mxu0 0.0
      %273 = vmatpush1.msra.mxu0 0.0
      %274 = vmatprep.subr.mxu0 0.0
      %275 = vmatpush1.msra.mxu0 0.0
      %276 = vmatprep.subr.mxu0 0.0
      %277 = vmatpush1.msra.mxu0 0.0
      %278 = vmatprep.subr.mxu0 0.0
      %279 = vmatpush1.msra.mxu0 0.0
      %280 = vmatprep.subr.mxu0 0.0
      %281 = vmatpush1.msra.mxu0 0.0
      %282 = vmatprep.subr.mxu0 0.0
      %283 = vmatpush1.msra.mxu0 0.0
      %284 = vmatprep.subr.mxu0 0.0
      %285 = vmatpush1.msra.mxu0 0.0
      %286 = vmatprep.subr.mxu0 0.0
      %287 = vmatpush1.msra.mxu0 0.0
      %288 = vmatprep.subr.mxu0 0.0
      %289 = vmatpush1.msra.mxu0 0.0
      %290 = vmatprep.mubr.f32.mxu0 0.0
      %291 = vmatmul.mubr.f32.gmra.mrb[0].mxu0 %v220
      %v292 = vpop.f32.mrb[0].mxu0
      %v293 = vadd.f32 %v216, %v292
      %v294 = vpop.f32.mrb[0].mxu0
      %295 = vdwg.mxu0
      %v296 = vmax.f32 %v293, 0.0
      %v297 = vlaneseq
      %v298 = vand.u32 %v297, 127
      %s299 = smul.u32 %s21, 16
      %v300 = vstv %s299
      %v301 = vadd.s32 %v300, %v298
      %vm302 = vcmp.lt.s32.totalorder %v301, 16
      %v303 = vsel %vm302, 1, 0
      %vm304 = vcmp.eq.s32.totalorder %v303, 1
      %v305 = vsel %vm304, %v296, 0.0
      %v306 = vld [vmem:[%s3] sm:$0xff]
      %vm307 = vcmask 130048
      %v308 = vsel %vm307, %v305, 0.0
      %309 = vadd.xlane.f32.xlu0 %v308
      %v310 = vpop.xlane.xlu0 %309
      %v311 = vadd.f32 %v306, %v310
      %vm312 = vcmask 7168
      %313 = vst.msk [vmem:[%s3] sm:$0xff] %vm312, %v311
      %v314 = vld [vmem:[%s4] sm:$0xff]
      %v315 = vmul.f32 %v305, %v305
      %v316 = vsel %vm307, %v315, 0.0
      %317 = vadd.xlane.f32.xlu0 %v316
      %v318 = vpop.xlane.xlu0 %317
      %v319 = vadd.f32 %v314, %v318
      %320 = vst.msk [vmem:[%s4] sm:$0xff] %vm312, %v319
      // Predicated region
      $region37: #{tpu_custom_call.1} parent=31 // pred_check
        %p321 = pneg %p111
      $region38: #{tpu_custom_call.1} parent=31 // pred_check_branch
        %323 = sbr.rel (%p321) target = $region40
      $region39: #{tpu_custom_call.1} parent=31 // pred_region
        _
      $region40: #{tpu_custom_call.1} parent=31 // pred_fallthru
        _
      // Predicated region
      $region41: #{tpu_custom_call.1} parent=31 // pred_check
        %p324 = pneg %p132
      $region42: #{tpu_custom_call.1} parent=31 // pred_check_branch
        %326 = sbr.rel (%p324) target = $region44
      $region43: #{tpu_custom_call.1} parent=31 // pred_region
        _
      $region44: #{tpu_custom_call.1} parent=31 // pred_fallthru
        _
      // Predicated region
      $region45: #{tpu_custom_call.1} parent=31 // pred_check
        %p327 = pneg %p111
      $region46: #{tpu_custom_call.1} parent=31 // pred_check_branch
        %329 = sbr.rel (%p327) target = $region48
      $region47: #{tpu_custom_call.1} parent=31 // pred_region
        _
      $region48: #{tpu_custom_call.1} parent=31 // pred_fallthru
        _
      // Predicated region
      $region49: #{tpu_custom_call.1} parent=31 // pred_check
        %p330 = pneg %p132
      $region50: #{tpu_custom_call.1} parent=31 // pred_check_branch
        %332 = sbr.rel (%p330) target = $region52
      $region51: #{tpu_custom_call.1} parent=31 // pred_region
        _
      $region52: #{tpu_custom_call.1} parent=31 // pred_fallthru
        _
    $region32: #{tpu_custom_call.1} parent=5 // pred_fallthru
      _
    %p333 = scmp.le.s32.totalorder 2, %s11
    // Predicated region
    $region53: #{tpu_custom_call.1} parent=5 // pred_check
      %p334 = pneg %p333
    $region54: #{tpu_custom_call.1} parent=5 // pred_check_branch
      %336 = sbr.rel (%p334) target = $region56
    $region55: #{tpu_custom_call.1} parent=5 // pred_region
      %s337 = ssub.s32 %s11, 2
    $region56: #{tpu_custom_call.1} parent=5 // pred_fallthru
      _
  $region6: #{tpu_custom_call.1} parent=0 // loop_footer
    %s15 = sadd.s32 1, %s11
  $region7: #{tpu_custom_call.1} parent=0 // loop_footer_branch
    %10 = sbr.rel target = $region3
  $region8: #{tpu_custom_call.1} parent=0 // loop_exit
    _

</llo_original>
